<compile_context>
chip_gen: v6e
topology: v6e:2x2x1
jax: 0.10.0
libtpu: 0.0.40
codegen_flags: <defaults>
</compile_context>

<pallas_src>
import functools

import jax
import jax.numpy as jnp
from jax.experimental import pallas as pl
from jax.experimental.pallas import tpu as pltpu

EPS = 1e-5
_VMEM_LIMIT = 32 * 1024 * 1024   # safe on v5e/v6e (128 MiB) and v7x (64 MiB)


def _mish(x):
    # x * tanh(softplus(x)); stable softplus = max(x,0) + log1p(exp(-|x|))
    # (single exp/log1p/tanh, no where/minimum; matches F.softplus(threshold=20)
    #  to < 1e-8 for all x)
    sp = jnp.maximum(x, 0.0) + jnp.log1p(jnp.exp(-jnp.abs(x)))
    return x * jnp.tanh(sp)


# ------------------------------- kernels ------------------------------------

def _stats1_kernel(x_ref, w1_ref, p_ref):
    """conv1x1 on one batch tile; emit per-channel (sum, sum-of-squares)."""
    _, H, W, C = x_ref.shape
    x = x_ref[...].reshape(H * W, C)
    y1 = jnp.dot(x.astype(w1_ref.dtype), w1_ref[...],
                 preferred_element_type=jnp.float32)
    p_ref[:, 0:1, :] = jnp.sum(y1, axis=0, keepdims=True).reshape(1, 1, C)
    p_ref[:, 1:2, :] = jnp.sum(y1 * y1, axis=0, keepdims=True).reshape(1, 1, C)


def _mid_kernel(x_ref, w1_ref, s1_ref, t1_ref, w2_ref, y2_ref, p_ref, hp_ref):
    """conv1x1 -> folded BN1 -> Mish -> conv3x3 (one K=9C matmul) -> partials."""
    _, H, W, C = x_ref.shape
    x = x_ref[...].reshape(H * W, C)
    y1 = jnp.dot(x.astype(w1_ref.dtype), w1_ref[...],
                 preferred_element_type=jnp.float32)
    h = _mish(y1 * s1_ref[...] + t1_ref[...])            # f32 elementwise

    # Padded scratch for SAME conv: zero only the 1-pixel border (re-done each
    # grid step so it stays correct when the batch grid is split across cores);
    # the interior is fully overwritten below.
    zrow = jnp.zeros((1, 1, W + 2, C), hp_ref.dtype)
    hp_ref[:, 0:1, :, :] = zrow
    hp_ref[:, H + 1:H + 2, :, :] = zrow
    zcol = jnp.zeros((1, H + 2, 1, C), hp_ref.dtype)
    hp_ref[:, :, 0:1, :] = zcol
    hp_ref[:, :, W + 1:W + 2, :] = zcol
    hp_ref[:, 1:H + 1, 1:W + 1, :] = h.reshape(1, H, W, C).astype(hp_ref.dtype)

    # im2col of the 9 taps (lane-aligned concat) -> single MXU matmul with
    # K = 9*C instead of nine K=C matmuls + 8 accumulate adds.
    taps = [hp_ref[:, dy:dy + H, dx:dx + W, :]
            for dy in range(3) for dx in range(3)]
    hcat = jnp.concatenate(taps, axis=-1).reshape(H * W, 9 * C)
    y2 = jnp.dot(hcat.astype(w2_ref.dtype), w2_ref[...],
                 preferred_element_type=jnp.float32)

    y2_ref[...] = y2.reshape(1, H, W, C)
    p_ref[:, 0:1, :] = jnp.sum(y2, axis=0, keepdims=True).reshape(1, 1, C)
    p_ref[:, 1:2, :] = jnp.sum(y2 * y2, axis=0, keepdims=True).reshape(1, 1, C)


def _finish_kernel(x_ref, y2_ref, s2_ref, t2_ref, o_ref, *, shortcut):
    """folded BN2 -> Mish -> optional residual add (output aliases x)."""
    _, H, W, C = x_ref.shape
    y2 = y2_ref[...].reshape(H * W, C)
    h = _mish(y2 * s2_ref[...] + t2_ref[...])
    if shortcut:
        h = h + x_ref[...].reshape(H * W, C)
    o_ref[...] = h.reshape(1, H, W, C).astype(o_ref.dtype)


# ------------------------------- wrapper -------------------------------------

def _fold_bn(partials, inv_count, gamma, beta):
    """Reduce per-tile (sum, sumsq) partials -> folded BN scale/shift (exact)."""
    tot = jnp.sum(partials, axis=0)                       # (2, Cp) f32
    mean = tot[0] * inv_count
    var = jnp.maximum(tot[1] * inv_count - mean * mean, 0.0)   # biased var
    scale = gamma * jax.lax.rsqrt(var + EPS)
    shift = beta - mean * scale
    return scale.reshape(1, -1), shift.reshape(1, -1)


def resblock_forward(x_nhwc, params, shortcut=True, matmul_dtype=jnp.float32):
    """Apply len(params) residual blocks. x_nhwc: (N, H, W, C) float32."""
    N, H, W, C = x_nhwc.shape
    Cp = ((C + 127) // 128) * 128          # lane-dense channel padding
    pc = Cp - C
    x = jnp.pad(x_nhwc.astype(jnp.float32), ((0, 0), (0, 0), (0, 0), (0, pc)))
    inv_count = 1.0 / float(N * H * W)

    cparams = pltpu.CompilerParams(dimension_semantics=("parallel",),
                                   vmem_limit_bytes=_VMEM_LIMIT)
    tile = pl.BlockSpec((1, H, W, Cp), lambda n: (n, 0, 0, 0))
    pspec = pl.BlockSpec((1, 2, Cp), lambda n: (n, 0, 0))

    def full2d(shape):
        return pl.BlockSpec(shape, lambda n: (0, 0))

    stats1_call = pl.pallas_call(
        _stats1_kernel,
        grid=(N,),
        in_specs=[tile, full2d((Cp, Cp))],
        out_specs=pspec,
        out_shape=jax.ShapeDtypeStruct((N, 2, Cp), jnp.float32),
        compiler_params=cparams,
    )

    mid_call = pl.pallas_call(
        _mid_kernel,
        grid=(N,),
        in_specs=[tile, full2d((Cp, Cp)), full2d((1, Cp)), full2d((1, Cp)),
                  full2d((9 * Cp, Cp))],
        out_specs=(tile, pspec),
        out_shape=(jax.ShapeDtypeStruct((N, H, W, Cp), jnp.float32),
                   jax.ShapeDtypeStruct((N, 2, Cp), jnp.float32)),
        scratch_shapes=[pltpu.VMEM((1, H + 2, W + 2, Cp), jnp.float32)],
        compiler_params=cparams,
    )

    finish_call = pl.pallas_call(
        functools.partial(_finish_kernel, shortcut=shortcut),
        grid=(N,),
        in_specs=[tile, tile, full2d((1, Cp)), full2d((1, Cp))],
        out_specs=tile,
        out_shape=jax.ShapeDtypeStruct((N, H, W, Cp), jnp.float32),
        input_output_aliases={0: 0},       # residual written in place over x
        compiler_params=cparams,
    )

    for p in params:
        w1 = jnp.pad(p["w1"], ((0, pc), (0, pc))).astype(matmul_dtype)
        w2 = jnp.pad(p["w2"], ((0, 0), (0, 0), (0, pc), (0, pc)))
        w2 = w2.reshape(9 * Cp, Cp).astype(matmul_dtype)   # (ky,kx,cin) x cout
        g1 = jnp.pad(p["g1"], (0, pc))
        b1 = jnp.pad(p["b1"], (0, pc))
        g2 = jnp.pad(p["g2"], (0, pc))
        b2 = jnp.pad(p["b2"], (0, pc))

        part1 = stats1_call(x, w1)
        s1, t1 = _fold_bn(part1, inv_count, g1, b1)
        y2, part2 = mid_call(x, w1, s1, t1, w2)
        s2, t2 = _fold_bn(part2, inv_count, g2, b2)
        x = finish_call(x, y2, s2, t2)

    return x[..., :C]


# ---------------- pure-JAX reference (for correctness check) ----------------

def _mish_ref(x):
    sp = jnp.where(x > 20.0, x, jnp.log1p(jnp.exp(jnp.minimum(x, 20.0))))
    return x * jnp.tanh(sp)


def ref_resblock(x_nhwc, params, shortcut=True):
    dn = ("NHWC", "HWIO", "NHWC")
    C = x_nhwc.shape[-1]

    def bn_mish(h, g, b):
        mean = jnp.mean(h, axis=(0, 1, 2), keepdims=True)
        var = jnp.mean((h - mean) ** 2, axis=(0, 1, 2), keepdims=True)
        h = (h - mean) * jax.lax.rsqrt(var + EPS) * g.reshape(1, 1, 1, C) \
            + b.reshape(1, 1, 1, C)
        return _mish_ref(h)

    x = x_nhwc
    for p in params:
        h = jax.lax.conv_general_dilated(
            x, p["w1"].reshape(1, 1, C, C), (1, 1), "SAME",
            dimension_numbers=dn)
        h = bn_mish(h, p["g1"], p["b1"])
        h = jax.lax.conv_general_dilated(
            h, p["w2"], (1, 1), "SAME", dimension_numbers=dn)
        h = bn_mish(h, p["g2"], p["b2"])
        x = x + h if shortcut else h
    return x


def make_params(key, ch, nblocks):
    params = []
    for _ in range(nblocks):
        key, k1, k2, k3, k4, k5, k6 = jax.random.split(key, 7)
        params.append({
            # conv1x1 weight stored as (C_in, C_out)   [PyTorch (Cout,Cin,1,1)]
            "w1": jax.random.normal(k1, (ch, ch), jnp.float32) / jnp.sqrt(ch),
            "g1": 1.0 + 0.1 * jax.random.normal(k2, (ch,), jnp.float32),
            "b1": 0.1 * jax.random.normal(k3, (ch,), jnp.float32),
            # conv3x3 weight stored HWIO: (3, 3, C_in, C_out)
            "w2": jax.random.normal(k4, (3, 3, ch, ch), jnp.float32)
                  / jnp.sqrt(9.0 * ch),
            "g2": 1.0 + 0.1 * jax.random.normal(k5, (ch,), jnp.float32),
            "b2": 0.1 * jax.random.normal(k6, (ch,), jnp.float32),
        })
    return params


if __name__ == "__main__":
    key = jax.random.PRNGKey(0)
    N, C, H, W = 2, 4, 16, 16   # PyTorch NCHW input shape
    nblocks = 2

    kx, kp = jax.random.split(key)
    x_nchw = jax.random.normal(kx, (N, C, H, W), jnp.float32)
    x_nhwc = jnp.transpose(x_nchw, (0, 2, 3, 1))   # kernel layout: NHWC

    params = make_params(kp, C, nblocks)
    ref_nhwc = ref_resblock(x_nhwc, params, shortcut=True)

    # f32 MXU operands: faithful to the f32 PyTorch module.
    out_f32 = jax.block_until_ready(
        resblock_forward(x_nhwc, params, shortcut=True,
                         matmul_dtype=jnp.float32))
    assert out_f32.shape == (N, H, W, C)
    assert jnp.allclose(out_f32, ref_nhwc, atol=2e-4, rtol=2e-4), (
        float(jnp.max(jnp.abs(out_f32 - ref_nhwc))))

    # bf16 MXU operands, f32 accumulation + f32 BN/Mish (v6e/v7x fast path).
    # Looser tolerance: operand rounding only; BN renormalizes the scale.
    out_bf16 = jax.block_until_ready(
        resblock_forward(x_nhwc, params, shortcut=True,
                         matmul_dtype=jnp.bfloat16))
    assert jnp.allclose(out_bf16, ref_nhwc, atol=1e-1, rtol=1e-1), (
        float(jnp.max(jnp.abs(out_bf16 - ref_nhwc))))

    # back to NCHW to mirror the PyTorch output convention (shape check only)
    out_nchw = jnp.transpose(out_f32, (0, 3, 1, 2))
    assert out_nchw.shape == (N, C, H, W)

    print("KERNEL_OK")
</pallas_src>

<mosaic_0001>
module attributes {stable_mosaic.version = 11 : i64} {
  func.func @_stats1_kernel(%arg0: i32, %arg1: memref<1x16x16x128xf32, #tpu.memory_space<vmem>>, %arg2: memref<128x128xf32, #tpu.memory_space<vmem>>, %arg3: memref<1x2x128xf32, #tpu.memory_space<vmem>>) attributes {dimension_semantics = [#tpu.dimension_semantics<parallel>], iteration_bounds = array<i64: 2>, scalar_prefetch = 0 : i64, scratch_operands = 0 : i64, tpu.core_type = #tpu.core_type<tc>, window_params = [{transform_indices = @transform_0, window_bounds = array<i64: 1, 16, 16, 128>}, {pipeline_mode = #tpu.pipeline_mode<synchronous>, transform_indices = @transform_1, window_bounds = array<i64: 128, 128>}, {transform_indices = @transform_2, window_bounds = array<i64: 1, 2, 128>}]} {
    %c0 = arith.constant 0 : index
    %c0_0 = arith.constant 0 : index
    %c0_1 = arith.constant 0 : index
    %c0_2 = arith.constant 0 : index
    %0 = vector.load %arg1[%c0, %c0_0, %c0_1, %c0_2] : memref<1x16x16x128xf32, #tpu.memory_space<vmem>>, vector<1x16x16x128xf32>
    %1 = vector.shape_cast %0 : vector<1x16x16x128xf32> to vector<256x128xf32>
    %c0_3 = arith.constant 0 : index
    %c0_4 = arith.constant 0 : index
    %2 = vector.load %arg2[%c0_3, %c0_4] : memref<128x128xf32, #tpu.memory_space<vmem>>, vector<128x128xf32>
    %cst = arith.constant dense<0.000000e+00> : vector<256x128xf32>
    %3 = tpu.matmul %1, %2, %cst {dimension_numbers = #tpu.dot_dimension_numbers<[1], [0], [0], [1], [0, 0, 1, 1], [], []>} : vector<256x128xf32>, vector<128x128xf32>, vector<256x128xf32> -> vector<256x128xf32>
    %cst_5 = arith.constant dense<0.000000e+00> : vector<128xf32>
    %4 = vector.multi_reduction <add>, %3, %cst_5 [0] : vector<256x128xf32> to vector<128xf32>
    %5 = vector.shape_cast %4 : vector<128xf32> to vector<1x128xf32>
    %6 = vector.shape_cast %5 : vector<1x128xf32> to vector<1x1x128xf32>
    %c0_6 = arith.constant 0 : index
    %c0_7 = arith.constant 0 : index
    %c0_8 = arith.constant 0 : index
    %7 = vector.load %arg3[%c0_6, %c0_7, %c0_8] : memref<1x2x128xf32, #tpu.memory_space<vmem>>, vector<1x1x128xf32>
    tpu.vector_store %arg3[%c0_6, %c0_7, %c0_8], %6 {strides = array<i32>} : memref<1x2x128xf32, #tpu.memory_space<vmem>>, vector<1x1x128xf32>,
    %8 = arith.mulf %3, %3 : vector<256x128xf32>
    %cst_9 = arith.constant dense<0.000000e+00> : vector<128xf32>
    %9 = vector.multi_reduction <add>, %8, %cst_9 [0] : vector<256x128xf32> to vector<128xf32>
    %10 = vector.shape_cast %9 : vector<128xf32> to vector<1x128xf32>
    %11 = vector.shape_cast %10 : vector<1x128xf32> to vector<1x1x128xf32>
    %c0_10 = arith.constant 0 : index
    %c1 = arith.constant 1 : index
    %c0_11 = arith.constant 0 : index
    %12 = vector.load %arg3[%c0_10, %c1, %c0_11] : memref<1x2x128xf32, #tpu.memory_space<vmem>>, vector<1x1x128xf32>
    tpu.vector_store %arg3[%c0_10, %c1, %c0_11], %11 {strides = array<i32>} : memref<1x2x128xf32, #tpu.memory_space<vmem>>, vector<1x1x128xf32>,
    return
  }
  func.func @transform_0(%arg0: i32) -> (i32, i32, i32, i32) {
    %c0_i32 = arith.constant 0 : i32
    %c0_i32_0 = arith.constant 0 : i32
    %c0_i32_1 = arith.constant 0 : i32
    %c0_i32_2 = arith.constant 0 : i32
    return %arg0, %c0_i32, %c0_i32_0, %c0_i32_1 : i32, i32, i32, i32
  }
  func.func @transform_1(%arg0: i32) -> (i32, i32) {
    %c0_i32 = arith.constant 0 : i32
    %c0_i32_0 = arith.constant 0 : i32
    %c0_i32_1 = arith.constant 0 : i32
    return %c0_i32, %c0_i32_0 : i32, i32
  }
  func.func @transform_2(%arg0: i32) -> (i32, i32, i32) {
    %c0_i32 = arith.constant 0 : i32
    %c0_i32_0 = arith.constant 0 : i32
    %c0_i32_1 = arith.constant 0 : i32
    return %arg0, %c0_i32, %c0_i32_0 : i32, i32, i32
  }
}

</mosaic_0001>

<llo_original>
// kernel: tpu_custom_call.1
$region0: #{tpu_custom_call.1}
  #allocation0 [shape = 'u32[]', space=smem, size = 0x4, offset = 0x4, fixed_abs, tag = 'smem constant byte address 0x4 - core index']
  #allocation1 [shape = 'u32[144,128]{1,0:T(1,128)}', space=vmem, size = 0x12000, scoped, tag = 'internal scratch']
  %s0 = inlined_call_operand.hbm [shape: f32[2,16,16,128], index: 0, kind: input, shape index: {}]
  %s1 = inlined_call_operand.hbm [shape: f32[128,128], index: 1, kind: input, shape index: {}]
  %s2 = inlined_call_operand.hbm [shape: f32[2,2,128], index: 2, kind: output, shape index: {}]
  %s3 = sld [smem:[#allocation0]]
  $region49: #{tpu_custom_call.1} parent=0
    _
  %s5 = ssub.s32 1, %s3
  %s6 = scalar_select 0, %s5, %s3
  $region1: #{tpu_custom_call.1} parent=0
    #allocation2 [shape = 'u8[262144]{0}', space=vmem, size = 0x40000, scoped, tag = 'input window, operand 0']
    #allocation3 [shape = 's32[2]{0}', space=sflag, size = 0x8, scoped, tag = 'scoped memory for tpu_custom_call.1']
    #allocation4 [shape = 's32[2]{0}', space=sflag, size = 0x8, scoped, tag = 'scoped memory for tpu_custom_call.1']
    #allocation5 [shape = 'u8[65536]{0}', space=vmem, size = 0x10000, scoped, tag = 'input window, operand 1, single buffered']
    #allocation6 [shape = 's32[1]{0}', space=sflag, size = 0x4, scoped, tag = 'scoped memory for tpu_custom_call.1']
    #allocation7 [shape = 'u8[2048]{0}', space=vmem, size = 0x800, scoped, tag = 'output window, operand 0']
    %7 = vsyncpa [#allocation3], 0
    %s8 = scalar_lea.sflag [#allocation3], 1
    %9 = vsyncpa %s8, 0
    %10 = vsyncpa [#allocation6], 0
    %11 = vsyncpa [#allocation4], 0
    %s12 = scalar_lea.sflag [#allocation4], 1
    %13 = vsyncpa %s12, 0
    loop: start=0, step=1, limit=4
    $region2: #{tpu_custom_call.1} parent=1 // loop_pre_header
      _
    $region3: #{tpu_custom_call.1} parent=1 // loop_header
      %s15 = sphi 0, %s19
      %p16 = scmp.ge.s32.totalorder %s15, 4
      %s25 = sphi 0, %s27
      %s28 = sphi 0, %s25
      %s29 = sphi 0, %s28
      %s45 = sphi 0, %s29
      %s49 = sphi 0, %s49
      %s51 = sphi 0, %s49
      %s52 = sphi 0, %s51
      %s66 = sphi 0, %s52
      %s72 = sphi 0, %s74
      %s75 = sphi 0, %s72
      %s76 = sphi 0, %s75
      %s92 = sphi 0, %s76
    $region4: #{tpu_custom_call.1} parent=1 // loop_header_branch
      %18 = sbr.rel (%p16) target = $region8
    $region5: #{tpu_custom_call.1} parent=1 // loop_body
      %s20 = ssub.s32 %s15, 1
      %s21 = ssub.s32 %s15, 2
      %s22 = sadd.s32 %s15, 1
      %s23 = ssub.s32 %s15, %s22
      %p24 = scmp.eq.s32.totalorder %s23, 0
      %s26 = sadd.s32 %s25, 1
      %s27 = scalar_select %p24, %s25, %s26
      %p30 = pneg %p24
      %p31 = scmp.eq.s32.totalorder %s15, 1
      %p32 = por %p30, %p31
      %p33 = scmp.ne.s32.totalorder %s25, %s28
      %p34 = scmp.eq.s32.totalorder %s15, 0
      %p35 = por %p33, %p34
      %p36 = scmp.ne.s32.totalorder %s25, %s28
      %p37 = scmp.eq.s32.totalorder %s20, 1
      %p38 = por %p36, %p37
      %p39 = scmp.ne.s32.totalorder %s28, %s29
      %p40 = scmp.eq.s32.totalorder %s20, 0
      %p41 = por %p39, %p40
      %p42 = scmp.ne.s32.totalorder %s28, %s29
      %p43 = scmp.eq.s32.totalorder %s21, 1
      %p44 = por %p42, %p43
      %p46 = scmp.ne.s32.totalorder %s29, %s45
      %p47 = scmp.eq.s32.totalorder %s21, 0
      %p48 = por %p46, %p47
      %s50 = sadd.s32 %s49, 1
      %p53 = scmp.eq.s32.totalorder %s15, 1
      %p54 = scmp.ne.s32.totalorder %s49, %s51
      %p55 = scmp.eq.s32.totalorder %s15, 0
      %p56 = por %p54, %p55
      %p57 = scmp.ne.s32.totalorder %s49, %s51
      %p58 = scmp.eq.s32.totalorder %s20, 1
      %p59 = por %p57, %p58
      %p60 = scmp.ne.s32.totalorder %s51, %s52
      %p61 = scmp.eq.s32.totalorder %s20, 0
      %p62 = por %p60, %p61
      %p63 = scmp.ne.s32.totalorder %s51, %s52
      %p64 = scmp.eq.s32.totalorder %s21, 1
      %p65 = por %p63, %p64
      %p67 = scmp.ne.s32.totalorder %s52, %s66
      %p68 = scmp.eq.s32.totalorder %s21, 0
      %p69 = por %p67, %p68
      %s70 = ssub.s32 %s15, %s22
      %p71 = scmp.eq.s32.totalorder %s70, 0
      %s73 = sadd.s32 %s72, 1
      %s74 = scalar_select %p71, %s72, %s73
      %p77 = pneg %p71
      %p78 = scmp.eq.s32.totalorder %s15, 1
      %p79 = por %p77, %p78
      %p80 = scmp.ne.s32.totalorder %s72, %s75
      %p81 = scmp.eq.s32.totalorder %s15, 0
      %p82 = por %p80, %p81
      %p83 = scmp.ne.s32.totalorder %s72, %s75
      %p84 = scmp.eq.s32.totalorder %s20, 1
      %p85 = por %p83, %p84
      %p86 = scmp.ne.s32.totalorder %s75, %s76
      %p87 = scmp.eq.s32.totalorder %s20, 0
      %p88 = por %p86, %p87
      %p89 = scmp.ne.s32.totalorder %s75, %s76
      %p90 = scmp.eq.s32.totalorder %s21, 1
      %p91 = por %p89, %p90
      %p93 = scmp.ne.s32.totalorder %s76, %s92
      %p94 = scmp.eq.s32.totalorder %s21, 0
      %p95 = por %p93, %p94
      %p96 = scmp.le.s32.totalorder 1, %s15
      %p97 = scmp.lt.s32.totalorder %s15, 3
      %p98 = pnand %p96, %p97
      %p99 = pneg %p98
      // Predicated region
      $region9: #{tpu_custom_call.1} parent=5 // pred_check
        _
      $region10: #{tpu_custom_call.1} parent=5 // pred_check_branch
        %101 = sbr.rel (%p98) target = $region12
      $region11: #{tpu_custom_call.1} parent=5 // pred_region
        %s102 = ssub.s32 %s15, 1
        // Predicated region
        $region13: #{tpu_custom_call.1} parent=11 // pred_check
          %p103 = pneg %p62
        $region14: #{tpu_custom_call.1} parent=11 // pred_check_branch
          %105 = sbr.rel (%p103) target = $region16
        $region15: #{tpu_custom_call.1} parent=11 // pred_region
          %s107 = ssub.s32 2048, 2048
          %108 = vsyncadd [#allocation6], %s107
          %s109 = sshll.u32 [#allocation5], 4
          %s110 = int_to_ptr.vmem [resolvable:$true] %s109
          %115 = dma.hbm_to_vmem [thread:$0]  %s1, 2048, %s110, [#allocation6], 128, 128, 8
        $region16: #{tpu_custom_call.1} parent=11 // pred_fallthru
          _
      $region12: #{tpu_custom_call.1} parent=5 // pred_fallthru
        _
      %p116 = scmp.lt.s32.totalorder %s15, 2
      // Predicated region
      $region17: #{tpu_custom_call.1} parent=5 // pred_check
        %p117 = pneg %p116
      $region18: #{tpu_custom_call.1} parent=5 // pred_check_branch
        %119 = sbr.rel (%p117) target = $region20
      $region19: #{tpu_custom_call.1} parent=5 // pred_region
        // Predicated region
        $region21: #{tpu_custom_call.1} parent=19 // pred_check
          %p120 = pneg %p35
        $region22: #{tpu_custom_call.1} parent=19 // pred_check_branch
          %122 = sbr.rel (%p120) target = $region24
        $region23: #{tpu_custom_call.1} parent=19 // pred_region
          %s123 = sand.u32 %s25, 1
          %s124 = scalar_lea.sflag [#allocation3], %s123
          %s125 = sand.u32 %s25, 1
          %s126 = smul.addr %s125, 256
          %s127 = scalar_lea.vmem [#allocation2], %s126
          %s129 = ssub.s32 4096, 4096
          %130 = vsyncadd %s124, %s129
          %s131 = smul.addr %s15, 32
          %s132 = smul.addr %s131, 128
          %s133 = scalar_lea.hbm %s0, %s132
          %s134 = sshll.u32 %s127, 4
          %s135 = int_to_ptr.vmem [resolvable:$true] %s134
          %140 = dma.hbm_to_vmem [thread:$0]  %s133, 4096, %s135, %s124, 128, 128, 8
        $region24: #{tpu_custom_call.1} parent=19 // pred_fallthru
          _
      $region20: #{tpu_custom_call.1} parent=5 // pred_fallthru
        _
      %p141 = scmp.le.s32.totalorder 1, %s15
      %p142 = scmp.lt.s32.totalorder %s15, 3
      %p143 = pnand %p141, %p142
      %p144 = pneg %p143
      // Predicated region
      $region25: #{tpu_custom_call.1} parent=5 // pred_check
        _
      $region26: #{tpu_custom_call.1} parent=5 // pred_check_branch
        %146 = sbr.rel (%p143) target = $region28
      $region27: #{tpu_custom_call.1} parent=5 // pred_region
        %s147 = ssub.s32 %s15, 1
        %s148 = sand.u32 %s28, 1
        %s149 = scalar_lea.sflag [#allocation3], %s148
        %s150 = sand.u32 %s28, 1
        %s151 = smul.addr %s150, 256
        %s152 = scalar_lea.vmem [#allocation2], %s151
        // Predicated region
        $region29: #{tpu_custom_call.1} parent=27 // pred_check
          %p153 = pneg %p41
        $region30: #{tpu_custom_call.1} parent=27 // pred_check_branch
          %155 = sbr.rel (%p153) target = $region32
        $region31: #{tpu_custom_call.1} parent=27 // pred_region
          %156 = dma.done %s149, 4096
        $region32: #{tpu_custom_call.1} parent=27 // pred_fallthru
          _
        // Predicated region
        $region33: #{tpu_custom_call.1} parent=27 // pred_check
          %p157 = pneg %p62
        $region34: #{tpu_custom_call.1} parent=27 // pred_check_branch
          %159 = sbr.rel (%p157) target = $region36
        $region35: #{tpu_custom_call.1} parent=27 // pred_region
          %160 = dma.done [#allocation6], 2048
        $region36: #{tpu_custom_call.1} parent=27 // pred_fallthru
          _
        %s161 = sand.u32 %s28, 1
        %s162 = scalar_lea.sflag [#allocation3], %s161
        %s163 = sand.u32 %s28, 1
        %s164 = smul.addr %s163, 256
        %s165 = scalar_lea.vmem [#allocation2], %s164
        %p166 = pneg %p41
        %p167 = pneg %p38
        %p168 = pneg %p62
        %p169 = pneg %p59
        %p170 = pneg %p88
        %p171 = pneg %p85
        %s172 = sand.u32 %s75, 1
        %s173 = scalar_lea.sflag [#allocation4], %s172
        %s174 = sand.u32 %s75, 1
        %s175 = smul.addr %s174, 2
        %s176 = scalar_lea.vmem [#allocation7], %s175
        %v177 = vld [vmem:[%s152] sm:$0xff]
        %v178 = vld [vmem:[%s152 + $0x8] sm:$0xff]
        %v179 = vld [vmem:[%s152 + $0x10] sm:$0xff]
        %v180 = vld [vmem:[%s152 + $0x18] sm:$0xff]
        %v181 = vld [vmem:[%s152 + $0x20] sm:$0xff]
        %v182 = vld [vmem:[%s152 + $0x28] sm:$0xff]
        %v183 = vld [vmem:[%s152 + $0x30] sm:$0xff]
        %v184 = vld [vmem:[%s152 + $0x38] sm:$0xff]
        %v185 = vld [vmem:[%s152 + $0x40] sm:$0xff]
        %v186 = vld [vmem:[%s152 + $0x48] sm:$0xff]
        %v187 = vld [vmem:[%s152 + $0x50] sm:$0xff]
        %v188 = vld [vmem:[%s152 + $0x58] sm:$0xff]
        %v189 = vld [vmem:[%s152 + $0x60] sm:$0xff]
        %v190 = vld [vmem:[%s152 + $0x68] sm:$0xff]
        %v191 = vld [vmem:[%s152 + $0x70] sm:$0xff]
        %v192 = vld [vmem:[%s152 + $0x78] sm:$0xff]
        %v193 = vld [vmem:[%s152 + $0x80] sm:$0xff]
        %v194 = vld [vmem:[%s152 + $0x88] sm:$0xff]
        %v195 = vld [vmem:[%s152 + $0x90] sm:$0xff]
        %v196 = vld [vmem:[%s152 + $0x98] sm:$0xff]
        %v197 = vld [vmem:[%s152 + $0xa0] sm:$0xff]
        %v198 = vld [vmem:[%s152 + $0xa8] sm:$0xff]
        %v199 = vld [vmem:[%s152 + $0xb0] sm:$0xff]
        %v200 = vld [vmem:[%s152 + $0xb8] sm:$0xff]
        %v201 = vld [vmem:[%s152 + $0xc0] sm:$0xff]
        %v202 = vld [vmem:[%s152 + $0xc8] sm:$0xff]
        %v203 = vld [vmem:[%s152 + $0xd0] sm:$0xff]
        %v204 = vld [vmem:[%s152 + $0xd8] sm:$0xff]
        %v205 = vld [vmem:[%s152 + $0xe0] sm:$0xff]
        %v206 = vld [vmem:[%s152 + $0xe8] sm:$0xff]
        %v207 = vld [vmem:[%s152 + $0xf0] sm:$0xff]
        %v208 = vld [vmem:[%s152 + $0xf8] sm:$0xff]
        %v209 = vld [vmem:[#allocation5] sm:$0xff]
        %v210 = vld [vmem:[#allocation5 + $0x8] sm:$0xff]
        %v211 = vld [vmem:[#allocation5 + $0x10] sm:$0xff]
        %v212 = vld [vmem:[#allocation5 + $0x18] sm:$0xff]
        %v213 = vld [vmem:[#allocation5 + $0x20] sm:$0xff]
        %v214 = vld [vmem:[#allocation5 + $0x28] sm:$0xff]
        %v215 = vld [vmem:[#allocation5 + $0x30] sm:$0xff]
        %v216 = vld [vmem:[#allocation5 + $0x38] sm:$0xff]
        %v217 = vld [vmem:[#allocation5 + $0x40] sm:$0xff]
        %v218 = vld [vmem:[#allocation5 + $0x48] sm:$0xff]
        %v219 = vld [vmem:[#allocation5 + $0x50] sm:$0xff]
        %v220 = vld [vmem:[#allocation5 + $0x58] sm:$0xff]
        %v221 = vld [vmem:[#allocation5 + $0x60] sm:$0xff]
        %v222 = vld [vmem:[#allocation5 + $0x68] sm:$0xff]
        %v223 = vld [vmem:[#allocation5 + $0x70] sm:$0xff]
        %v224 = vld [vmem:[#allocation5 + $0x78] sm:$0xff]
        %225 = vmatprep.subr.mxu0 0.0
        %226 = vmatpush1.msra.mxu0 %v224
        %227 = vmatprep.subr.mxu0 0.0
        %228 = vmatpush1.msra.mxu0 %v223
        %229 = vmatprep.subr.mxu0 0.0
        %230 = vmatpush1.msra.mxu0 %v222
        %231 = vmatprep.subr.mxu0 0.0
        %232 = vmatpush1.msra.mxu0 %v221
        %233 = vmatprep.subr.mxu0 0.0
        %234 = vmatpush1.msra.mxu0 %v220
        %235 = vmatprep.subr.mxu0 0.0
        %236 = vmatpush1.msra.mxu0 %v219
        %237 = vmatprep.subr.mxu0 0.0
        %238 = vmatpush1.msra.mxu0 %v218
        %239 = vmatprep.subr.mxu0 0.0
        %240 = vmatpush1.msra.mxu0 %v217
        %241 = vmatprep.subr.mxu0 0.0
        %242 = vmatpush1.msra.mxu0 %v216
        %243 = vmatprep.subr.mxu0 0.0
        %244 = vmatpush1.msra.mxu0 %v215
        %245 = vmatprep.subr.mxu0 0.0
        %246 = vmatpush1.msra.mxu0 %v214
        %247 = vmatprep.subr.mxu0 0.0
        %248 = vmatpush1.msra.mxu0 %v213
        %249 = vmatprep.subr.mxu0 0.0
        %250 = vmatpush1.msra.mxu0 %v212
        %251 = vmatprep.subr.mxu0 0.0
        %252 = vmatpush1.msra.mxu0 %v211
        %253 = vmatprep.subr.mxu0 0.0
        %254 = vmatpush1.msra.mxu0 %v210
        %255 = vmatprep.subr.mxu0 0.0
        %256 = vmatpush1.msra.mxu0 %v209
        %257 = vmatprep.subr.mxu0 0.0
        %258 = vmatpush2.msra.mxu0 0.0
        %259 = vmatprep.subr.mxu0 0.0
        %260 = vmatpush2.msra.mxu0 0.0
        %261 = vmatprep.subr.mxu0 0.0
        %262 = vmatpush2.msra.mxu0 0.0
        %263 = vmatprep.subr.mxu0 0.0
        %264 = vmatpush2.msra.mxu0 0.0
        %265 = vmatprep.subr.mxu0 0.0
        %266 = vmatpush2.msra.mxu0 0.0
        %267 = vmatprep.subr.mxu0 0.0
        %268 = vmatpush2.msra.mxu0 0.0
        %269 = vmatprep.subr.mxu0 0.0
        %270 = vmatpush2.msra.mxu0 0.0
        %271 = vmatprep.subr.mxu0 0.0
        %272 = vmatpush2.msra.mxu0 0.0
        %273 = vmatprep.subr.mxu0 0.0
        %274 = vmatpush2.msra.mxu0 0.0
        %275 = vmatprep.subr.mxu0 0.0
        %276 = vmatpush2.msra.mxu0 0.0
        %277 = vmatprep.subr.mxu0 0.0
        %278 = vmatpush2.msra.mxu0 0.0
        %279 = vmatprep.subr.mxu0 0.0
        %280 = vmatpush2.msra.mxu0 0.0
        %281 = vmatprep.subr.mxu0 0.0
        %282 = vmatpush2.msra.mxu0 0.0
        %283 = vmatprep.subr.mxu0 0.0
        %284 = vmatpush2.msra.mxu0 0.0
        %285 = vmatprep.subr.mxu0 0.0
        %286 = vmatpush2.msra.mxu0 0.0
        %287 = vmatprep.subr.mxu0 0.0
        %288 = vmatpush2.msra.mxu0 0.0
        %289 = vmatprep.mubr.f32.mxu0 0.0
        %290 = vmatmul.mubr.f32.gmra.mxu0 %v177
        %v291 = vpop.f32.mrf.mxu0
        %v292 = vadd.f32 0.0, %v291
        %v293 = vpop.f32.mrf.mxu0
        %294 = vmatprep.mubr.f32.mxu0 0.0
        %295 = vmatmul.mubr.f32.gmra.mxu0 %v178
        %v296 = vpop.f32.mrf.mxu0
        %v297 = vadd.f32 0.0, %v296
        %v298 = vpop.f32.mrf.mxu0
        %299 = vmatprep.mubr.f32.mxu0 0.0
        %300 = vmatmul.mubr.f32.gmra.mxu0 %v179
        %v301 = vpop.f32.mrf.mxu0
        %v302 = vadd.f32 0.0, %v301
        %v303 = vpop.f32.mrf.mxu0
        %304 = vmatprep.mubr.f32.mxu0 0.0
        %305 = vmatmul.mubr.f32.gmra.mxu0 %v180
        %v306 = vpop.f32.mrf.mxu0
        %v307 = vadd.f32 0.0, %v306
        %v308 = vpop.f32.mrf.mxu0
        %309 = vmatprep.mubr.f32.mxu0 0.0
        %310 = vmatmul.mubr.f32.gmra.mxu0 %v181
        %v311 = vpop.f32.mrf.mxu0
        %v312 = vadd.f32 0.0, %v311
        %v313 = vpop.f32.mrf.mxu0
        %314 = vmatprep.mubr.f32.mxu0 0.0
        %315 = vmatmul.mubr.f32.gmra.mxu0 %v182
        %v316 = vpop.f32.mrf.mxu0
        %v317 = vadd.f32 0.0, %v316
        %v318 = vpop.f32.mrf.mxu0
        %319 = vmatprep.mubr.f32.mxu0 0.0
        %320 = vmatmul.mubr.f32.gmra.mxu0 %v183
        %v321 = vpop.f32.mrf.mxu0
        %v322 = vadd.f32 0.0, %v321
        %v323 = vpop.f32.mrf.mxu0
        %324 = vmatprep.mubr.f32.mxu0 0.0
        %325 = vmatmul.mubr.f32.gmra.mxu0 %v184
        %v326 = vpop.f32.mrf.mxu0
        %v327 = vadd.f32 0.0, %v326
        %v328 = vpop.f32.mrf.mxu0
        %329 = vmatprep.mubr.f32.mxu0 0.0
        %330 = vmatmul.mubr.f32.gmra.mxu0 %v185
        %v331 = vpop.f32.mrf.mxu0
        %v332 = vadd.f32 0.0, %v331
        %v333 = vpop.f32.mrf.mxu0
        %334 = vmatprep.mubr.f32.mxu0 0.0
        %335 = vmatmul.mubr.f32.gmra.mxu0 %v186
        %v336 = vpop.f32.mrf.mxu0
        %v337 = vadd.f32 0.0, %v336
        %v338 = vpop.f32.mrf.mxu0
        %339 = vmatprep.mubr.f32.mxu0 0.0
        %340 = vmatmul.mubr.f32.gmra.mxu0 %v187
        %v341 = vpop.f32.mrf.mxu0
        %v342 = vadd.f32 0.0, %v341
        %v343 = vpop.f32.mrf.mxu0
        %344 = vmatprep.mubr.f32.mxu0 0.0
        %345 = vmatmul.mubr.f32.gmra.mxu0 %v188
        %v346 = vpop.f32.mrf.mxu0
        %v347 = vadd.f32 0.0, %v346
        %v348 = vpop.f32.mrf.mxu0
        %349 = vmatprep.mubr.f32.mxu0 0.0
        %350 = vmatmul.mubr.f32.gmra.mxu0 %v189
        %v351 = vpop.f32.mrf.mxu0
        %v352 = vadd.f32 0.0, %v351
        %v353 = vpop.f32.mrf.mxu0
        %354 = vmatprep.mubr.f32.mxu0 0.0
        %355 = vmatmul.mubr.f32.gmra.mxu0 %v190
        %v356 = vpop.f32.mrf.mxu0
        %v357 = vadd.f32 0.0, %v356
        %v358 = vpop.f32.mrf.mxu0
        %359 = vmatprep.mubr.f32.mxu0 0.0
        %360 = vmatmul.mubr.f32.gmra.mxu0 %v191
        %v361 = vpop.f32.mrf.mxu0
        %v362 = vadd.f32 0.0, %v361
        %v363 = vpop.f32.mrf.mxu0
        %364 = vmatprep.mubr.f32.mxu0 0.0
        %365 = vmatmul.mubr.f32.gmra.mxu0 %v192
        %v366 = vpop.f32.mrf.mxu0
        %v367 = vadd.f32 0.0, %v366
        %v368 = vpop.f32.mrf.mxu0
        %369 = vmatprep.mubr.f32.mxu0 0.0
        %370 = vmatmul.mubr.f32.gmra.mxu0 %v193
        %v371 = vpop.f32.mrf.mxu0
        %v372 = vadd.f32 0.0, %v371
        %v373 = vpop.f32.mrf.mxu0
        %374 = vmatprep.mubr.f32.mxu0 0.0
        %375 = vmatmul.mubr.f32.gmra.mxu0 %v194
        %v376 = vpop.f32.mrf.mxu0
        %v377 = vadd.f32 0.0, %v376
        %v378 = vpop.f32.mrf.mxu0
        %379 = vmatprep.mubr.f32.mxu0 0.0
        %380 = vmatmul.mubr.f32.gmra.mxu0 %v195
        %v381 = vpop.f32.mrf.mxu0
        %v382 = vadd.f32 0.0, %v381
        %v383 = vpop.f32.mrf.mxu0
        %384 = vmatprep.mubr.f32.mxu0 0.0
        %385 = vmatmul.mubr.f32.gmra.mxu0 %v196
        %v386 = vpop.f32.mrf.mxu0
        %v387 = vadd.f32 0.0, %v386
        %v388 = vpop.f32.mrf.mxu0
        %389 = vmatprep.mubr.f32.mxu0 0.0
        %390 = vmatmul.mubr.f32.gmra.mxu0 %v197
        %v391 = vpop.f32.mrf.mxu0
        %v392 = vadd.f32 0.0, %v391
        %v393 = vpop.f32.mrf.mxu0
        %394 = vmatprep.mubr.f32.mxu0 0.0
        %395 = vmatmul.mubr.f32.gmra.mxu0 %v198
        %v396 = vpop.f32.mrf.mxu0
        %v397 = vadd.f32 0.0, %v396
        %v398 = vpop.f32.mrf.mxu0
        %399 = vmatprep.mubr.f32.mxu0 0.0
        %400 = vmatmul.mubr.f32.gmra.mxu0 %v199
        %v401 = vpop.f32.mrf.mxu0
        %v402 = vadd.f32 0.0, %v401
        %v403 = vpop.f32.mrf.mxu0
        %404 = vmatprep.mubr.f32.mxu0 0.0
        %405 = vmatmul.mubr.f32.gmra.mxu0 %v200
        %v406 = vpop.f32.mrf.mxu0
        %v407 = vadd.f32 0.0, %v406
        %v408 = vpop.f32.mrf.mxu0
        %409 = vmatprep.mubr.f32.mxu0 0.0
        %410 = vmatmul.mubr.f32.gmra.mxu0 %v201
        %v411 = vpop.f32.mrf.mxu0
        %v412 = vadd.f32 0.0, %v411
        %v413 = vpop.f32.mrf.mxu0
        %414 = vmatprep.mubr.f32.mxu0 0.0
        %415 = vmatmul.mubr.f32.gmra.mxu0 %v202
        %v416 = vpop.f32.mrf.mxu0
        %v417 = vadd.f32 0.0, %v416
        %v418 = vpop.f32.mrf.mxu0
        %419 = vmatprep.mubr.f32.mxu0 0.0
        %420 = vmatmul.mubr.f32.gmra.mxu0 %v203
        %v421 = vpop.f32.mrf.mxu0
        %v422 = vadd.f32 0.0, %v421
        %v423 = vpop.f32.mrf.mxu0
        %424 = vmatprep.mubr.f32.mxu0 0.0
        %425 = vmatmul.mubr.f32.gmra.mxu0 %v204
        %v426 = vpop.f32.mrf.mxu0
        %v427 = vadd.f32 0.0, %v426
        %v428 = vpop.f32.mrf.mxu0
        %429 = vmatprep.mubr.f32.mxu0 0.0
        %430 = vmatmul.mubr.f32.gmra.mxu0 %v205
        %v431 = vpop.f32.mrf.mxu0
        %v432 = vadd.f32 0.0, %v431
        %v433 = vpop.f32.mrf.mxu0
        %434 = vmatprep.mubr.f32.mxu0 0.0
        %435 = vmatmul.mubr.f32.gmra.mxu0 %v206
        %v436 = vpop.f32.mrf.mxu0
        %v437 = vadd.f32 0.0, %v436
        %v438 = vpop.f32.mrf.mxu0
        %439 = vmatprep.mubr.f32.mxu0 0.0
        %440 = vmatmul.mubr.f32.gmra.mxu0 %v207
        %v441 = vpop.f32.mrf.mxu0
        %v442 = vadd.f32 0.0, %v441
        %v443 = vpop.f32.mrf.mxu0
        %444 = vmatprep.mubr.f32.mxu0 0.0
        %445 = vmatmul.mubr.f32.gmra.mxu0 %v208
        %v446 = vpop.f32.mrf.mxu0
        %v447 = vadd.f32 0.0, %v446
        %v448 = vpop.f32.mrf.mxu0
        %449 = vdwg.mxu0
        %v450 = vadd.f32 %v292, %v297
        %v451 = vadd.f32 %v450, %v302
        %v452 = vadd.f32 %v451, %v307
        %v453 = vadd.f32 %v452, %v312
        %v454 = vadd.f32 %v453, %v317
        %v455 = vadd.f32 %v454, %v322
        %v456 = vadd.f32 %v455, %v327
        %v457 = vadd.f32 %v456, %v332
        %v458 = vadd.f32 %v457, %v337
        %v459 = vadd.f32 %v458, %v342
        %v460 = vadd.f32 %v459, %v347
        %v461 = vadd.f32 %v460, %v352
        %v462 = vadd.f32 %v461, %v357
        %v463 = vadd.f32 %v462, %v362
        %v464 = vadd.f32 %v463, %v367
        %v465 = vadd.f32 %v464, %v372
        %v466 = vadd.f32 %v465, %v377
        %v467 = vadd.f32 %v466, %v382
        %v468 = vadd.f32 %v467, %v387
        %v469 = vadd.f32 %v468, %v392
        %v470 = vadd.f32 %v469, %v397
        %v471 = vadd.f32 %v470, %v402
        %v472 = vadd.f32 %v471, %v407
        %v473 = vadd.f32 %v472, %v412
        %v474 = vadd.f32 %v473, %v417
        %v475 = vadd.f32 %v474, %v422
        %v476 = vadd.f32 %v475, %v427
        %v477 = vadd.f32 %v476, %v432
        %v478 = vadd.f32 %v477, %v437
        %v479 = vadd.f32 %v478, %v442
        %v480 = vadd.f32 %v479, %v447
        %v481 = vrot.slane %v480, 4
        %v482 = vadd.f32 %v480, %v481
        %v483 = vrot.slane %v482, 2
        %v484 = vadd.f32 %v482, %v483
        %v485 = vrot.slane %v484, 1
        %v486 = vadd.f32 %v484, %v485
        %487 = vst [vmem:[%s176] sm:$0x1] %v486
        %v488 = vmul.f32 %v292, %v292
        %v489 = vmul.f32 %v297, %v297
        %v490 = vmul.f32 %v302, %v302
        %v491 = vmul.f32 %v307, %v307
        %v492 = vmul.f32 %v312, %v312
        %v493 = vmul.f32 %v317, %v317
        %v494 = vmul.f32 %v322, %v322
        %v495 = vmul.f32 %v327, %v327
        %v496 = vmul.f32 %v332, %v332
        %v497 = vmul.f32 %v337, %v337
        %v498 = vmul.f32 %v342, %v342
        %v499 = vmul.f32 %v347, %v347
        %v500 = vmul.f32 %v352, %v352
        %v501 = vmul.f32 %v357, %v357
        %v502 = vmul.f32 %v362, %v362
        %v503 = vmul.f32 %v367, %v367
        %v504 = vmul.f32 %v372, %v372
        %v505 = vmul.f32 %v377, %v377
        %v506 = vmul.f32 %v382, %v382
        %v507 = vmul.f32 %v387, %v387
        %v508 = vmul.f32 %v392, %v392
        %v509 = vmul.f32 %v397, %v397
        %v510 = vmul.f32 %v402, %v402
        %v511 = vmul.f32 %v407, %v407
        %v512 = vmul.f32 %v412, %v412
        %v513 = vmul.f32 %v417, %v417
        %v514 = vmul.f32 %v422, %v422
        %v515 = vmul.f32 %v427, %v427
        %v516 = vmul.f32 %v432, %v432
        %v517 = vmul.f32 %v437, %v437
        %v518 = vmul.f32 %v442, %v442
        %v519 = vmul.f32 %v447, %v447
        %v520 = vadd.f32 %v488, %v489
        %v521 = vadd.f32 %v520, %v490
        %v522 = vadd.f32 %v521, %v491
        %v523 = vadd.f32 %v522, %v492
        %v524 = vadd.f32 %v523, %v493
        %v525 = vadd.f32 %v524, %v494
        %v526 = vadd.f32 %v525, %v495
        %v527 = vadd.f32 %v526, %v496
        %v528 = vadd.f32 %v527, %v497
        %v529 = vadd.f32 %v528, %v498
        %v530 = vadd.f32 %v529, %v499
        %v531 = vadd.f32 %v530, %v500
        %v532 = vadd.f32 %v531, %v501
        %v533 = vadd.f32 %v532, %v502
        %v534 = vadd.f32 %v533, %v503
        %v535 = vadd.f32 %v534, %v504
        %v536 = vadd.f32 %v535, %v505
        %v537 = vadd.f32 %v536, %v506
        %v538 = vadd.f32 %v537, %v507
        %v539 = vadd.f32 %v538, %v508
        %v540 = vadd.f32 %v539, %v509
        %v541 = vadd.f32 %v540, %v510
        %v542 = vadd.f32 %v541, %v511
        %v543 = vadd.f32 %v542, %v512
        %v544 = vadd.f32 %v543, %v513
        %v545 = vadd.f32 %v544, %v514
        %v546 = vadd.f32 %v545, %v515
        %v547 = vadd.f32 %v546, %v516
        %v548 = vadd.f32 %v547, %v517
        %v549 = vadd.f32 %v548, %v518
        %v550 = vadd.f32 %v549, %v519
        %v551 = vrot.slane %v550, 4
        %v552 = vadd.f32 %v550, %v551
        %v553 = vrot.slane %v552, 2
        %v554 = vadd.f32 %v552, %v553
        %v555 = vrot.slane %v554, 1
        %v556 = vadd.f32 %v554, %v555
        %557 = vst [vmem:[%s176 + $0x1] sm:$0x1] %v556
        %s558 = sand.u32 %s75, 1
        %s559 = scalar_lea.sflag [#allocation4], %s558
        %s560 = sand.u32 %s75, 1
        %s561 = smul.addr %s560, 2
        %s562 = scalar_lea.vmem [#allocation7], %s561
        // Predicated region
        $region37: #{tpu_custom_call.1} parent=27 // pred_check
          %p563 = pneg %p85
        $region38: #{tpu_custom_call.1} parent=27 // pred_check_branch
          %565 = sbr.rel (%p563) target = $region40
        $region39: #{tpu_custom_call.1} parent=27 // pred_region
          %s567 = ssub.s32 32, 32
          %568 = vsyncadd %s559, %s567
          %s569 = smul.addr %s20, 32
          %s570 = scalar_lea.hbm %s2, %s569
          %s572 = sshll.u32 %s562, 4
          %s573 = int_to_ptr.vmem [resolvable:$true] %s572
          %575 = dma.vmem_to_hbm [thread:$0]  %s573, 32, %s570, %s559
        $region40: #{tpu_custom_call.1} parent=27 // pred_fallthru
          _
      $region28: #{tpu_custom_call.1} parent=5 // pred_fallthru
        _
      %p576 = scmp.le.s32.totalorder 2, %s15
      // Predicated region
      $region41: #{tpu_custom_call.1} parent=5 // pred_check
        %p577 = pneg %p576
      $region42: #{tpu_custom_call.1} parent=5 // pred_check_branch
        %579 = sbr.rel (%p577) target = $region44
      $region43: #{tpu_custom_call.1} parent=5 // pred_region
        %s580 = ssub.s32 %s15, 2
        // Predicated region
        $region45: #{tpu_custom_call.1} parent=43 // pred_check
          %p581 = pneg %p91
        $region46: #{tpu_custom_call.1} parent=43 // pred_check_branch
          %583 = sbr.rel (%p581) target = $region48
        $region47: #{tpu_custom_call.1} parent=43 // pred_region
          %s584 = sand.u32 %s76, 1
          %s585 = scalar_lea.sflag [#allocation4], %s584
          %s586 = sand.u32 %s76, 1
          %s587 = smul.addr %s586, 2
          %s588 = scalar_lea.vmem [#allocation7], %s587
          %589 = dma.done %s585, 32
        $region48: #{tpu_custom_call.1} parent=43 // pred_fallthru
          _
      $region44: #{tpu_custom_call.1} parent=5 // pred_fallthru
        _
    $region6: #{tpu_custom_call.1} parent=1 // loop_footer
      %s19 = sadd.s32 1, %s15
    $region7: #{tpu_custom_call.1} parent=1 // loop_footer_branch
      %14 = sbr.rel target = $region3
    $region8: #{tpu_custom_call.1} parent=1 // loop_exit
      _
    %590 = vsyncpa [#allocation3], 1
    %s591 = scalar_lea.sflag [#allocation3], 1
    %592 = vsyncpa %s591, 1
    %593 = vsyncpa [#allocation6], 1
    %594 = vsyncpa [#allocation4], 1
    %s595 = scalar_lea.sflag [#allocation4], 1
    %596 = vsyncpa %s595, 1

</llo_original>
